<compile_context>
chip_gen: v7x
topology: tpu7x:2x2x1
jax: 0.10.0
libtpu: 0.0.40
codegen_flags: <defaults>
</compile_context>

<pallas_src>
import jax
import jax.numpy as jnp
from jax import lax
from jax.experimental import pallas as pl
from jax.experimental.pallas import tpu as pltpu


def _make_graphconv_kernel(B, P):
    def graphconv_kernel(cols_ref, w_ref, b_ref, out_ref):
        w = w_ref[...]          # (Cout, K)
        b = b_ref[...]          # (Cout, 1)
        cols = cols_ref[...]    # (K, 2*B*P)   [x_b0 .. x_b{B-1} | n_b0 .. n_b{B-1}]

        # Single fused circular-conv matmul for both inputs and all batches
        # (one MXU issue/drain instead of 2*B small ones).
        h = jnp.dot(w, cols, preferred_element_type=jnp.float32) + b   # (Cout, 2*B*P)

        for bi in range(B):     # static Python loop, B is small
            hx = h[:, bi * P:(bi + 1) * P]              # (N=Cout, F=P)
            hn = h[:, (B + bi) * P:(B + bi + 1) * P]    # (N=Cout, F=P)

            # a[n, m] = sum_f hx[n, f] * hn[m, f]   (torch 'bnf,bmf->bnm')
            a = lax.dot_general(hx, hn, (((1,), (1,)), ((), ())),
                                preferred_element_type=jnp.float32)    # (N, N)

            # LeakyReLU(0.2)
            a = jnp.where(a > 0, a, 0.2 * a)

            # torch softmax(dim=1) on (B, N, M) == softmax over axis 0 here.
            a = a - jnp.max(a, axis=0, keepdims=True)
            e = jnp.exp(a)
            s = e * pl.reciprocal(jnp.sum(e, axis=0, keepdims=True), approx=True)

            # out[n, f] = sum_m s[n, m] * hx[m, f]  ->  (Cout, P), lane-dense store.
            out_ref[bi] = jnp.dot(s, hx, preferred_element_type=jnp.float32)

    return graphconv_kernel


def _circular_pad(x, pad):
    if pad == 0:
        return x
    return jnp.pad(x, ((0, 0), (0, 0), (pad, pad), (pad, pad)), mode="wrap")


def _im2col_kp(xpad, kh, kw, stride, h_out, w_out):
    # (B, Cin, Hp, Wp) -> (B, K, P) with K = Cin*kh*kw flattened in (cin, i, j)
    # order (matches weight.reshape(Cout, -1)) and P = h_out*w_out last (lanes).
    B, Cin, _, _ = xpad.shape
    cols = []
    for i in range(kh):
        for j in range(kw):
            cols.append(xpad[:, :, i:i + stride * h_out:stride,
                                   j:j + stride * w_out:stride])
    p = jnp.stack(cols, axis=2)                           # (B, Cin, kh*kw, Ho, Wo)
    return p.reshape(B, Cin * kh * kw, h_out * w_out)     # (B, K, P)


def graph_conv_forward(x, n, weight, bias, stride, padding):
    """x, n: (B, Cin, H, W) NCHW.  weight: (Cout, Cin, kH, kW).  bias: (Cout,)."""
    B, Cin, H, W = x.shape
    Cout, _, kH, kW = weight.shape
    h_out = (H + 2 * padding - kH) // stride + 1
    w_out = (W + 2 * padding - kW) // stride + 1
    P = h_out * w_out
    K = Cin * kH * kW

    px = _im2col_kp(_circular_pad(x, padding), kH, kW, stride, h_out, w_out)
    pn = _im2col_kp(_circular_pad(n, padding), kH, kW, stride, h_out, w_out)
    # Combined column slab: (K, 2*B*P), column order [x batches | n batches].
    cols = jnp.concatenate([px, pn], axis=0)              # (2B, K, P)
    cols = cols.transpose(1, 0, 2).reshape(K, 2 * B * P).astype(jnp.float32)

    w2d = weight.reshape(Cout, K).astype(jnp.float32)     # (Cout, K)
    b2d = bias.reshape(Cout, 1).astype(jnp.float32)       # (Cout, 1)

    # Single gridless pallas_call: ~150 KB of inputs fits VMEM trivially on
    # v5e/v6e/v7x, so a batch grid would only add per-step pipeline overhead.
    out = pl.pallas_call(
        _make_graphconv_kernel(B, P),
        out_shape=jax.ShapeDtypeStruct((B, Cout, P), jnp.float32),
        in_specs=[
            pl.BlockSpec(memory_space=pltpu.MemorySpace.VMEM),
            pl.BlockSpec(memory_space=pltpu.MemorySpace.VMEM),
            pl.BlockSpec(memory_space=pltpu.MemorySpace.VMEM),
        ],
        out_specs=pl.BlockSpec(memory_space=pltpu.MemorySpace.VMEM),
    )(cols, w2d, b2d)

    # (B, Cout, P) -> (B, Cout, h_out, w_out) == torch (B, N, C, F); pure reshape.
    return out.reshape(B, Cout, h_out, w_out)


def _reference(x, n, weight, bias, stride, padding):
    # Pure-JAX reference mirroring the torch forward.
    def conv(inp):
        xp = _circular_pad(inp, padding)
        y = lax.conv_general_dilated(
            xp, weight, window_strides=(stride, stride), padding="VALID",
            dimension_numbers=("NCHW", "OIHW", "NCHW"))
        return y + bias[None, :, None, None]

    h1, h2 = conv(x), conv(n)
    B, N, C, F = h1.shape
    xf = h1.reshape(B, N, C * F)
    nf = h2.reshape(B, N, C * F)
    a = jnp.einsum("bnf,bmf->bnm", xf, nf)
    a = jnp.where(a > 0, a, 0.2 * a)
    s = jax.nn.softmax(a, axis=1)
    return jnp.einsum("bnm,bmf->bnf", s, xf).reshape(B, N, C, F)


if __name__ == "__main__":
    # Module hyperparameters (feat_len is unused in the torch forward).
    in_channels, out_channels = 4, 8
    kernel_size, stride, padding = 3, 1, 1
    B, H, W = 2, 16, 16

    key = jax.random.PRNGKey(0)
    kx, kn, kw, kb = jax.random.split(key, 4)
    x = jax.random.normal(kx, (B, in_channels, H, W), dtype=jnp.float32)
    n = jax.random.normal(kn, (B, in_channels, H, W), dtype=jnp.float32)
    weight = 0.05 * jax.random.normal(
        kw, (out_channels, in_channels, kernel_size, kernel_size), dtype=jnp.float32)
    bias = 0.05 * jax.random.normal(kb, (out_channels,), dtype=jnp.float32)

    out = graph_conv_forward(x, n, weight, bias, stride, padding)
    out = jax.block_until_ready(out)

    ref = jax.block_until_ready(_reference(x, n, weight, bias, stride, padding))
    assert out.shape == (B, out_channels, H, W), out.shape
    assert jnp.allclose(out, ref, rtol=1e-3, atol=1e-3), (
        float(jnp.max(jnp.abs(out - ref))))

    print("KERNEL_OK")
</pallas_src>

<mosaic_0001>
module attributes {stable_mosaic.version = 11 : i64} {
  func.func @graphconv_kernel(%arg0: memref<36x1024xf32, #tpu.memory_space<vmem>>, %arg1: memref<8x36xf32, #tpu.memory_space<vmem>>, %arg2: memref<8x1xf32, #tpu.memory_space<vmem>>, %arg3: memref<2x8x256xf32, #tpu.memory_space<vmem>>) attributes {dimension_semantics = [], scalar_prefetch = 0 : i64, scratch_operands = 0 : i64, tpu.core_type = #tpu.core_type<tc>} {
    %c0 = arith.constant 0 : index
    %c0_0 = arith.constant 0 : index
    %0 = vector.load %arg1[%c0, %c0_0] : memref<8x36xf32, #tpu.memory_space<vmem>>, vector<8x36xf32>
    %c0_1 = arith.constant 0 : index
    %c0_2 = arith.constant 0 : index
    %1 = vector.load %arg2[%c0_1, %c0_2] : memref<8x1xf32, #tpu.memory_space<vmem>>, vector<8x1xf32>
    %c0_3 = arith.constant 0 : index
    %c0_4 = arith.constant 0 : index
    %2 = vector.load %arg0[%c0_3, %c0_4] : memref<36x1024xf32, #tpu.memory_space<vmem>>, vector<36x1024xf32>
    %cst = arith.constant dense<0.000000e+00> : vector<8x1024xf32>
    %3 = tpu.matmul %0, %2, %cst {dimension_numbers = #tpu.dot_dimension_numbers<[1], [0], [0], [1], [0, 0, 1, 1], [], []>} : vector<8x36xf32>, vector<36x1024xf32>, vector<8x1024xf32> -> vector<8x1024xf32>
    %4 = vector.broadcast %1 : vector<8x1xf32> to vector<8x1024xf32>
    %5 = arith.addf %3, %4 : vector<8x1024xf32>
    %6 = vector.extract_strided_slice %5 {offsets = [0, 0], sizes = [8, 256], strides = [1, 1]} : vector<8x1024xf32> to vector<8x256xf32>
    %7 = vector.extract_strided_slice %5 {offsets = [0, 512], sizes = [8, 256], strides = [1, 1]} : vector<8x1024xf32> to vector<8x256xf32>
    %cst_5 = arith.constant dense<0.000000e+00> : vector<8x8xf32>
    %8 = tpu.matmul %6, %7, %cst_5 {dimension_numbers = #tpu.dot_dimension_numbers<[1], [1], [0], [0], [0, 0, 1, 0], [], []>} : vector<8x256xf32>, vector<8x256xf32>, vector<8x8xf32> -> vector<8x8xf32>
    %cst_6 = arith.constant 0.000000e+00 : f32
    %9 = vector.broadcast %cst_6 : f32 to vector<8x8xf32>
    %10 = arith.cmpf ogt, %8, %9 : vector<8x8xf32>
    %cst_7 = arith.constant 2.000000e-01 : f32
    %11 = vector.broadcast %cst_7 : f32 to vector<8x8xf32>
    %12 = arith.mulf %11, %8 : vector<8x8xf32>
    %13 = arith.select %10, %8, %12 : vector<8x8xi1>, vector<8x8xf32>
    %cst_8 = arith.constant dense<0xFF800000> : vector<8xf32>
    %14 = vector.multi_reduction <maximumf>, %13, %cst_8 [0] : vector<8x8xf32> to vector<8xf32>
    %15 = vector.shape_cast %14 : vector<8xf32> to vector<1x8xf32>
    %16 = vector.broadcast %15 : vector<1x8xf32> to vector<8x8xf32>
    %17 = arith.subf %13, %16 : vector<8x8xf32>
    %18 = math.exp %17 : vector<8x8xf32>
    %cst_9 = arith.constant dense<0.000000e+00> : vector<8xf32>
    %19 = vector.multi_reduction <add>, %18, %cst_9 [0] : vector<8x8xf32> to vector<8xf32>
    %20 = vector.shape_cast %19 : vector<8xf32> to vector<1x8xf32>
    %21 = tpu.reciprocal %20 {approx = true} : vector<1x8xf32> -> vector<1x8xf32>
    %22 = vector.broadcast %21 : vector<1x8xf32> to vector<8x8xf32>
    %23 = arith.mulf %18, %22 : vector<8x8xf32>
    %cst_10 = arith.constant dense<0.000000e+00> : vector<8x256xf32>
    %24 = tpu.matmul %23, %6, %cst_10 {dimension_numbers = #tpu.dot_dimension_numbers<[1], [0], [0], [1], [0, 0, 1, 1], [], []>} : vector<8x8xf32>, vector<8x256xf32>, vector<8x256xf32> -> vector<8x256xf32>
    %c0_11 = arith.constant 0 : index
    %c0_12 = arith.constant 0 : index
    %c0_13 = arith.constant 0 : index
    %25 = vector.load %arg3[%c0_11, %c0_12, %c0_13] : memref<2x8x256xf32, #tpu.memory_space<vmem>>, vector<1x8x256xf32>
    %26 = vector.shape_cast %25 : vector<1x8x256xf32> to vector<8x256xf32>
    %27 = vector.shape_cast %24 : vector<8x256xf32> to vector<1x8x256xf32>
    tpu.vector_store %arg3[%c0_11, %c0_12, %c0_13], %27 {strides = array<i32>} : memref<2x8x256xf32, #tpu.memory_space<vmem>>, vector<1x8x256xf32>,
    %28 = vector.extract_strided_slice %5 {offsets = [0, 256], sizes = [8, 256], strides = [1, 1]} : vector<8x1024xf32> to vector<8x256xf32>
    %29 = vector.extract_strided_slice %5 {offsets = [0, 768], sizes = [8, 256], strides = [1, 1]} : vector<8x1024xf32> to vector<8x256xf32>
    %cst_14 = arith.constant dense<0.000000e+00> : vector<8x8xf32>
    %30 = tpu.matmul %28, %29, %cst_14 {dimension_numbers = #tpu.dot_dimension_numbers<[1], [1], [0], [0], [0, 0, 1, 0], [], []>} : vector<8x256xf32>, vector<8x256xf32>, vector<8x8xf32> -> vector<8x8xf32>
    %cst_15 = arith.constant 0.000000e+00 : f32
    %31 = vector.broadcast %cst_15 : f32 to vector<8x8xf32>
    %32 = arith.cmpf ogt, %30, %31 : vector<8x8xf32>
    %cst_16 = arith.constant 2.000000e-01 : f32
    %33 = vector.broadcast %cst_16 : f32 to vector<8x8xf32>
    %34 = arith.mulf %33, %30 : vector<8x8xf32>
    %35 = arith.select %32, %30, %34 : vector<8x8xi1>, vector<8x8xf32>
    %cst_17 = arith.constant dense<0xFF800000> : vector<8xf32>
    %36 = vector.multi_reduction <maximumf>, %35, %cst_17 [0] : vector<8x8xf32> to vector<8xf32>
    %37 = vector.shape_cast %36 : vector<8xf32> to vector<1x8xf32>
    %38 = vector.broadcast %37 : vector<1x8xf32> to vector<8x8xf32>
    %39 = arith.subf %35, %38 : vector<8x8xf32>
    %40 = math.exp %39 : vector<8x8xf32>
    %cst_18 = arith.constant dense<0.000000e+00> : vector<8xf32>
    %41 = vector.multi_reduction <add>, %40, %cst_18 [0] : vector<8x8xf32> to vector<8xf32>
    %42 = vector.shape_cast %41 : vector<8xf32> to vector<1x8xf32>
    %43 = tpu.reciprocal %42 {approx = true} : vector<1x8xf32> -> vector<1x8xf32>
    %44 = vector.broadcast %43 : vector<1x8xf32> to vector<8x8xf32>
    %45 = arith.mulf %40, %44 : vector<8x8xf32>
    %cst_19 = arith.constant dense<0.000000e+00> : vector<8x256xf32>
    %46 = tpu.matmul %45, %28, %cst_19 {dimension_numbers = #tpu.dot_dimension_numbers<[1], [0], [0], [1], [0, 0, 1, 1], [], []>} : vector<8x8xf32>, vector<8x256xf32>, vector<8x256xf32> -> vector<8x256xf32>
    %c1 = arith.constant 1 : index
    %c0_20 = arith.constant 0 : index
    %c0_21 = arith.constant 0 : index
    %47 = vector.load %arg3[%c1, %c0_20, %c0_21] : memref<2x8x256xf32, #tpu.memory_space<vmem>>, vector<1x8x256xf32>
    %48 = vector.shape_cast %47 : vector<1x8x256xf32> to vector<8x256xf32>
    %49 = vector.shape_cast %46 : vector<8x256xf32> to vector<1x8x256xf32>
    tpu.vector_store %arg3[%c1, %c0_20, %c0_21], %49 {strides = array<i32>} : memref<2x8x256xf32, #tpu.memory_space<vmem>>, vector<1x8x256xf32>,
    return
  }
}

</mosaic_0001>

<llo_original>
// kernel: tpu_custom_call.1
$region0: #{tpu_custom_call.1}
  #allocation0 [shape = 'u32[]', space=smem, size = 0x4, offset = 0x4, fixed_abs, tag = 'smem constant byte address 0x4 - core index']
  #allocation1 [shape = 'u32[144,128]{1,0:T(1,128)}', space=vmem, size = 0x12000, scoped, tag = 'internal scratch']
  %s0 = inlined_call_operand.hbm [shape: f32[36,1024], index: 0, kind: input, shape index: {}]
  %s1 = inlined_call_operand.vmem [shape: f32[8,36], index: 1, kind: input, shape index: {}]
  %s2 = inlined_call_operand.vmem [shape: f32[8,1], index: 2, kind: input, shape index: {}]
  %s3 = inlined_call_operand.hbm [shape: f32[2,8,256], index: 3, kind: output, shape index: {}]
  %s4 = sld [smem:[#allocation0]]
  $region26: #{tpu_custom_call.1} parent=0
    _
  %s6 = ssub.s32 1, %s4
  %s7 = scalar_select 0, %s6, %s4
  $region1: #{tpu_custom_call.1} parent=0
    #allocation2 [shape = 'u8[163840]{0}', space=vmem, size = 0x28000, scoped, tag = 'input window, operand 0, single buffered']
    #allocation3 [shape = 's32[1]{0}', space=sflag, size = 0x4, scoped, tag = 'scoped memory for tpu_custom_call.1']
    #allocation4 [shape = 's32[1]{0}', space=sflag, size = 0x4, scoped, tag = 'scoped memory for tpu_custom_call.1']
    #allocation5 [shape = 'u8[16384]{0}', space=vmem, size = 0x4000, scoped, tag = 'output window, operand 0, single buffered']
    %8 = vsyncpa [#allocation3], 0
    %9 = vsyncpa [#allocation4], 0
    // Predicated region
    $region2: #{tpu_custom_call.1} parent=1 // pred_check
      _
    $region3: #{tpu_custom_call.1} parent=1 // pred_check_branch
      %11 = sbr.rel (0) target = $region5
    $region4: #{tpu_custom_call.1} parent=1 // pred_region
      %s13 = ssub.s32 5120, 5120
      %14 = vsyncadd [#allocation3], %s13
      %s15 = sshll.u32 [#allocation2], 4
      %s16 = int_to_ptr.vmem [resolvable:$true] %s15
      %21 = dma.hbm_to_vmem [thread:$0]  %s0, 5120, %s16, [#allocation3], 1024, 1024, 64
    $region5: #{tpu_custom_call.1} parent=1 // pred_fallthru
      _
    // Predicated region
    $region6: #{tpu_custom_call.1} parent=1 // pred_check
      _
    $region7: #{tpu_custom_call.1} parent=1 // pred_check_branch
      %23 = sbr.rel (0) target = $region9
    $region8: #{tpu_custom_call.1} parent=1 // pred_region
      _
    $region9: #{tpu_custom_call.1} parent=1 // pred_fallthru
      _
    // Predicated region
    $region10: #{tpu_custom_call.1} parent=1 // pred_check
      _
    $region11: #{tpu_custom_call.1} parent=1 // pred_check_branch
      %25 = sbr.rel (0) target = $region13
    $region12: #{tpu_custom_call.1} parent=1 // pred_region
      _
    $region13: #{tpu_custom_call.1} parent=1 // pred_fallthru
      _
    // Predicated region
    $region14: #{tpu_custom_call.1} parent=1 // pred_check
      _
    $region15: #{tpu_custom_call.1} parent=1 // pred_check_branch
      %27 = sbr.rel (0) target = $region17
    $region16: #{tpu_custom_call.1} parent=1 // pred_region
      %28 = dma.done [#allocation3], 5120
    $region17: #{tpu_custom_call.1} parent=1 // pred_fallthru
      _
    %v29 = vld [vmem:[%s1] sm:$0xff]
    %v30 = vld [vmem:[%s2] sm:$0xff]
    %v31 = vld [vmem:[#allocation2] sm:$0xff]
    %v32 = vld [vmem:[#allocation2 + $0x8] sm:$0xff]
    %v33 = vld [vmem:[#allocation2 + $0x10] sm:$0xff]
    %v34 = vld [vmem:[#allocation2 + $0x18] sm:$0xff]
    %v35 = vld [vmem:[#allocation2 + $0x20] sm:$0xff]
    %v36 = vld [vmem:[#allocation2 + $0x28] sm:$0xff]
    %v37 = vld [vmem:[#allocation2 + $0x30] sm:$0xff]
    %v38 = vld [vmem:[#allocation2 + $0x38] sm:$0xff]
    %v39 = vld [vmem:[#allocation2 + $0x40] sm:$0xff]
    %v40 = vld [vmem:[#allocation2 + $0x48] sm:$0xff]
    %v41 = vld [vmem:[#allocation2 + $0x50] sm:$0xff]
    %v42 = vld [vmem:[#allocation2 + $0x58] sm:$0xff]
    %v43 = vld [vmem:[#allocation2 + $0x60] sm:$0xff]
    %v44 = vld [vmem:[#allocation2 + $0x68] sm:$0xff]
    %v45 = vld [vmem:[#allocation2 + $0x70] sm:$0xff]
    %v46 = vld [vmem:[#allocation2 + $0x78] sm:$0xff]
    %v47 = vld [vmem:[#allocation2 + $0x80] sm:$0xff]
    %v48 = vld [vmem:[#allocation2 + $0x88] sm:$0xff]
    %v49 = vld [vmem:[#allocation2 + $0x90] sm:$0xff]
    %v50 = vld [vmem:[#allocation2 + $0x98] sm:$0xff]
    %v51 = vld [vmem:[#allocation2 + $0xa0] sm:$0xff]
    %v52 = vld [vmem:[#allocation2 + $0xa8] sm:$0xff]
    %v53 = vld [vmem:[#allocation2 + $0xb0] sm:$0xff]
    %v54 = vld [vmem:[#allocation2 + $0xb8] sm:$0xff]
    %v55 = vld [vmem:[#allocation2 + $0xc0] sm:$0xff]
    %v56 = vld [vmem:[#allocation2 + $0xc8] sm:$0xff]
    %v57 = vld [vmem:[#allocation2 + $0xd0] sm:$0xff]
    %v58 = vld [vmem:[#allocation2 + $0xd8] sm:$0xff]
    %v59 = vld [vmem:[#allocation2 + $0xe0] sm:$0xff]
    %v60 = vld [vmem:[#allocation2 + $0xe8] sm:$0xff]
    %v61 = vld [vmem:[#allocation2 + $0xf0] sm:$0xff]
    %v62 = vld [vmem:[#allocation2 + $0xf8] sm:$0xff]
    %v63 = vld [vmem:[#allocation2 + $0x100] sm:$0xf]
    %v64 = vld [vmem:[#allocation2 + $0x108] sm:$0xf]
    %v65 = vld [vmem:[#allocation2 + $0x110] sm:$0xf]
    %v66 = vld [vmem:[#allocation2 + $0x118] sm:$0xf]
    %v67 = vld [vmem:[#allocation2 + $0x120] sm:$0xf]
    %v68 = vld [vmem:[#allocation2 + $0x128] sm:$0xf]
    %v69 = vld [vmem:[#allocation2 + $0x130] sm:$0xf]
    %v70 = vld [vmem:[#allocation2 + $0x138] sm:$0xf]
    %72 = vset.pattern.permute.xlu0 0
    %73 = vperm.xlu0 %72, %v30
    %v74 = vpop.permute.xlu0 %73
    %vm76 = vcmask 293888
    %v78 = vsel %vm76, %v29, 0
    %vm80 = vcmask 1043456
    %v82 = vsel %vm80, %v63, 0
    %v85 = vsel %vm80, %v64, 0
    %v88 = vsel %vm80, %v65, 0
    %v91 = vsel %vm80, %v66, 0
    %v94 = vsel %vm80, %v67, 0
    %v97 = vsel %vm80, %v68, 0
    %v100 = vsel %vm80, %v69, 0
    %v103 = vsel %vm80, %v70, 0
    %105 = vmatprep.subr.mxu0 %v32
    %106 = vmatpush1.msra.mxu0 %v31
    %107 = vmatprep.subr.mxu0 %v40
    %108 = vmatpush1.msra.mxu0 %v39
    %109 = vmatprep.subr.mxu0 %v48
    %110 = vmatpush1.msra.mxu0 %v47
    %111 = vmatprep.subr.mxu0 %v56
    %112 = vmatpush1.msra.mxu0 %v55
    %113 = vmatprep.subr.mxu0 %v85
    %114 = vmatpush1.msra.mxu0 %v82
    %115 = vmatprep.subr.mxu0 0.0
    %116 = vmatpush1.msra.mxu0 0.0
    %117 = vmatprep.subr.mxu0 0.0
    %118 = vmatpush1.msra.mxu0 0.0
    %119 = vmatprep.subr.mxu0 0.0
    %120 = vmatpush1.msra.mxu0 0.0
    %121 = vmatprep.subr.mxu0 0.0
    %122 = vmatpush1.msra.mxu0 0.0
    %123 = vmatprep.subr.mxu0 0.0
    %124 = vmatpush1.msra.mxu0 0.0
    %125 = vmatprep.subr.mxu0 0.0
    %126 = vmatpush1.msra.mxu0 0.0
    %127 = vmatprep.subr.mxu0 0.0
    %128 = vmatpush1.msra.mxu0 0.0
    %129 = vmatprep.subr.mxu0 0.0
    %130 = vmatpush1.msra.mxu0 0.0
    %131 = vmatprep.subr.mxu0 0.0
    %132 = vmatpush1.msra.mxu0 0.0
    %133 = vmatprep.subr.mxu0 0.0
    %134 = vmatpush1.msra.mxu0 0.0
    %135 = vmatprep.subr.mxu0 0.0
    %136 = vmatpush1.msra.mxu0 0.0
    %137 = vmatprep.subr.mxu0 0.0
    %138 = vmatpush1.msra.mxu0 0.0
    %139 = vmatprep.subr.mxu0 0.0
    %140 = vmatpush1.msra.mxu0 0.0
    %141 = vmatprep.subr.mxu0 0.0
    %142 = vmatpush1.msra.mxu0 0.0
    %143 = vmatprep.subr.mxu0 0.0
    %144 = vmatpush1.msra.mxu0 0.0
    %145 = vmatprep.subr.mxu0 0.0
    %146 = vmatpush1.msra.mxu0 0.0
    %147 = vmatprep.subr.mxu0 0.0
    %148 = vmatpush1.msra.mxu0 0.0
    %149 = vmatprep.subr.mxu0 0.0
    %150 = vmatpush1.msra.mxu0 0.0
    %151 = vmatprep.subr.mxu0 0.0
    %152 = vmatpush1.msra.mxu0 0.0
    %153 = vmatprep.subr.mxu0 0.0
    %154 = vmatpush1.msra.mxu0 0.0
    %155 = vmatprep.subr.mxu0 0.0
    %156 = vmatpush1.msra.mxu0 0.0
    %157 = vmatprep.subr.mxu0 0.0
    %158 = vmatpush1.msra.mxu0 0.0
    %159 = vmatprep.subr.mxu0 0.0
    %160 = vmatpush1.msra.mxu0 0.0
    %161 = vmatprep.subr.mxu0 0.0
    %162 = vmatpush1.msra.mxu0 0.0
    %163 = vmatprep.subr.mxu0 0.0
    %164 = vmatpush1.msra.mxu0 0.0
    %165 = vmatprep.subr.mxu0 0.0
    %166 = vmatpush1.msra.mxu0 0.0
    %167 = vmatprep.subr.mxu0 0.0
    %168 = vmatpush1.msra.mxu0 0.0
    %169 = vmatprep.mubr.f32.mxu0 0.0
    %170 = vmatmul.mubr.f32.gmra.mrb[0].mxu0 %v78
    %v171 = vpop.f32.mrb[0].mxu0
    %v172 = vadd.f32 %v74, %v171
    %v173 = vpop.f32.mrb[0].mxu0
    %v174 = vadd.f32 %v74, %v173
    %175 = vdwg.mxu0
    %176 = vmatprep.subr.mxu0 %v34
    %177 = vmatpush1.msra.mxu0 %v33
    %178 = vmatprep.subr.mxu0 %v42
    %179 = vmatpush1.msra.mxu0 %v41
    %180 = vmatprep.subr.mxu0 %v50
    %181 = vmatpush1.msra.mxu0 %v49
    %182 = vmatprep.subr.mxu0 %v58
    %183 = vmatpush1.msra.mxu0 %v57
    %184 = vmatprep.subr.mxu0 %v91
    %185 = vmatpush1.msra.mxu0 %v88
    %186 = vmatprep.subr.mxu0 0.0
    %187 = vmatpush1.msra.mxu0 0.0
    %188 = vmatprep.subr.mxu0 0.0
    %189 = vmatpush1.msra.mxu0 0.0
    %190 = vmatprep.subr.mxu0 0.0
    %191 = vmatpush1.msra.mxu0 0.0
    %192 = vmatprep.subr.mxu0 0.0
    %193 = vmatpush1.msra.mxu0 0.0
    %194 = vmatprep.subr.mxu0 0.0
    %195 = vmatpush1.msra.mxu0 0.0
    %196 = vmatprep.subr.mxu0 0.0
    %197 = vmatpush1.msra.mxu0 0.0
    %198 = vmatprep.subr.mxu0 0.0
    %199 = vmatpush1.msra.mxu0 0.0
    %200 = vmatprep.subr.mxu0 0.0
    %201 = vmatpush1.msra.mxu0 0.0
    %202 = vmatprep.subr.mxu0 0.0
    %203 = vmatpush1.msra.mxu0 0.0
    %204 = vmatprep.subr.mxu0 0.0
    %205 = vmatpush1.msra.mxu0 0.0
    %206 = vmatprep.subr.mxu0 0.0
    %207 = vmatpush1.msra.mxu0 0.0
    %208 = vmatprep.subr.mxu0 0.0
    %209 = vmatpush1.msra.mxu0 0.0
    %210 = vmatprep.subr.mxu0 0.0
    %211 = vmatpush1.msra.mxu0 0.0
    %212 = vmatprep.subr.mxu0 0.0
    %213 = vmatpush1.msra.mxu0 0.0
    %214 = vmatprep.subr.mxu0 0.0
    %215 = vmatpush1.msra.mxu0 0.0
    %216 = vmatprep.subr.mxu0 0.0
    %217 = vmatpush1.msra.mxu0 0.0
    %218 = vmatprep.subr.mxu0 0.0
    %219 = vmatpush1.msra.mxu0 0.0
    %220 = vmatprep.subr.mxu0 0.0
    %221 = vmatpush1.msra.mxu0 0.0
    %222 = vmatprep.subr.mxu0 0.0
    %223 = vmatpush1.msra.mxu0 0.0
    %224 = vmatprep.subr.mxu0 0.0
    %225 = vmatpush1.msra.mxu0 0.0
    %226 = vmatprep.subr.mxu0 0.0
    %227 = vmatpush1.msra.mxu0 0.0
    %228 = vmatprep.subr.mxu0 0.0
    %229 = vmatpush1.msra.mxu0 0.0
    %230 = vmatprep.subr.mxu0 0.0
    %231 = vmatpush1.msra.mxu0 0.0
    %232 = vmatprep.subr.mxu0 0.0
    %233 = vmatpush1.msra.mxu0 0.0
    %234 = vmatprep.subr.mxu0 0.0
    %235 = vmatpush1.msra.mxu0 0.0
    %236 = vmatprep.subr.mxu0 0.0
    %237 = vmatpush1.msra.mxu0 0.0
    %238 = vmatprep.subr.mxu0 0.0
    %239 = vmatpush1.msra.mxu0 0.0
    %240 = vmatprep.mubr.f32.mxu0 0.0
    %241 = vmatmul.mubr.f32.gmra.mrb[0].mxu0 %v78
    %v242 = vpop.f32.mrb[0].mxu0
    %v243 = vadd.f32 %v74, %v242
    %v244 = vpop.f32.mrb[0].mxu0
    %v245 = vadd.f32 %v74, %v244
    %246 = vdwg.mxu0
    %247 = vmatprep.subr.mxu0 %v36
    %248 = vmatpush1.msra.mxu0 %v35
    %249 = vmatprep.subr.mxu0 %v44
    %250 = vmatpush1.msra.mxu0 %v43
    %251 = vmatprep.subr.mxu0 %v52
    %252 = vmatpush1.msra.mxu0 %v51
    %253 = vmatprep.subr.mxu0 %v60
    %254 = vmatpush1.msra.mxu0 %v59
    %255 = vmatprep.subr.mxu0 %v97
    %256 = vmatpush1.msra.mxu0 %v94
    %257 = vmatprep.subr.mxu0 0.0
    %258 = vmatpush1.msra.mxu0 0.0
    %259 = vmatprep.subr.mxu0 0.0
    %260 = vmatpush1.msra.mxu0 0.0
    %261 = vmatprep.subr.mxu0 0.0
    %262 = vmatpush1.msra.mxu0 0.0
    %263 = vmatprep.subr.mxu0 0.0
    %264 = vmatpush1.msra.mxu0 0.0
    %265 = vmatprep.subr.mxu0 0.0
    %266 = vmatpush1.msra.mxu0 0.0
    %267 = vmatprep.subr.mxu0 0.0
    %268 = vmatpush1.msra.mxu0 0.0
    %269 = vmatprep.subr.mxu0 0.0
    %270 = vmatpush1.msra.mxu0 0.0
    %271 = vmatprep.subr.mxu0 0.0
    %272 = vmatpush1.msra.mxu0 0.0
    %273 = vmatprep.subr.mxu0 0.0
    %274 = vmatpush1.msra.mxu0 0.0
    %275 = vmatprep.subr.mxu0 0.0
    %276 = vmatpush1.msra.mxu0 0.0
    %277 = vmatprep.subr.mxu0 0.0
    %278 = vmatpush1.msra.mxu0 0.0
    %279 = vmatprep.subr.mxu0 0.0
    %280 = vmatpush1.msra.mxu0 0.0
    %281 = vmatprep.subr.mxu0 0.0
    %282 = vmatpush1.msra.mxu0 0.0
    %283 = vmatprep.subr.mxu0 0.0
    %284 = vmatpush1.msra.mxu0 0.0
    %285 = vmatprep.subr.mxu0 0.0
    %286 = vmatpush1.msra.mxu0 0.0
    %287 = vmatprep.subr.mxu0 0.0
    %288 = vmatpush1.msra.mxu0 0.0
    %289 = vmatprep.subr.mxu0 0.0
    %290 = vmatpush1.msra.mxu0 0.0
    %291 = vmatprep.subr.mxu0 0.0
    %292 = vmatpush1.msra.mxu0 0.0
    %293 = vmatprep.subr.mxu0 0.0
    %294 = vmatpush1.msra.mxu0 0.0
    %295 = vmatprep.subr.mxu0 0.0
    %296 = vmatpush1.msra.mxu0 0.0
    %297 = vmatprep.subr.mxu0 0.0
    %298 = vmatpush1.msra.mxu0 0.0
    %299 = vmatprep.subr.mxu0 0.0
    %300 = vmatpush1.msra.mxu0 0.0
    %301 = vmatprep.subr.mxu0 0.0
    %302 = vmatpush1.msra.mxu0 0.0
    %303 = vmatprep.subr.mxu0 0.0
    %304 = vmatpush1.msra.mxu0 0.0
    %305 = vmatprep.subr.mxu0 0.0
    %306 = vmatpush1.msra.mxu0 0.0
    %307 = vmatprep.subr.mxu0 0.0
    %308 = vmatpush1.msra.mxu0 0.0
    %309 = vmatprep.subr.mxu0 0.0
    %310 = vmatpush1.msra.mxu0 0.0
    %311 = vmatprep.mubr.f32.mxu0 0.0
    %312 = vmatmul.mubr.f32.gmra.mrb[0].mxu0 %v78
    %v313 = vpop.f32.mrb[0].mxu0
    %v314 = vadd.f32 %v74, %v313
    %v315 = vpop.f32.mrb[0].mxu0
    %v316 = vadd.f32 %v74, %v315
    %317 = vdwg.mxu0
    %318 = vmatprep.subr.mxu0 %v38
    %319 = vmatpush1.msra.mxu0 %v37
    %320 = vmatprep.subr.mxu0 %v46
    %321 = vmatpush1.msra.mxu0 %v45
    %322 = vmatprep.subr.mxu0 %v54
    %323 = vmatpush1.msra.mxu0 %v53
    %324 = vmatprep.subr.mxu0 %v62
    %325 = vmatpush1.msra.mxu0 %v61
    %326 = vmatprep.subr.mxu0 %v103
    %327 = vmatpush1.msra.mxu0 %v100
    %328 = vmatprep.subr.mxu0 0.0
    %329 = vmatpush1.msra.mxu0 0.0
    %330 = vmatprep.subr.mxu0 0.0
    %331 = vmatpush1.msra.mxu0 0.0
    %332 = vmatprep.subr.mxu0 0.0
    %333 = vmatpush1.msra.mxu0 0.0
    %334 = vmatprep.subr.mxu0 0.0
    %335 = vmatpush1.msra.mxu0 0.0
    %336 = vmatprep.subr.mxu0 0.0
    %337 = vmatpush1.msra.mxu0 0.0
    %338 = vmatprep.subr.mxu0 0.0
    %339 = vmatpush1.msra.mxu0 0.0
    %340 = vmatprep.subr.mxu0 0.0
    %341 = vmatpush1.msra.mxu0 0.0
    %342 = vmatprep.subr.mxu0 0.0
    %343 = vmatpush1.msra.mxu0 0.0
    %344 = vmatprep.subr.mxu0 0.0
    %345 = vmatpush1.msra.mxu0 0.0
    %346 = vmatprep.subr.mxu0 0.0
    %347 = vmatpush1.msra.mxu0 0.0
    %348 = vmatprep.subr.mxu0 0.0
    %349 = vmatpush1.msra.mxu0 0.0
    %350 = vmatprep.subr.mxu0 0.0
    %351 = vmatpush1.msra.mxu0 0.0
    %352 = vmatprep.subr.mxu0 0.0
    %353 = vmatpush1.msra.mxu0 0.0
    %354 = vmatprep.subr.mxu0 0.0
    %355 = vmatpush1.msra.mxu0 0.0
    %356 = vmatprep.subr.mxu0 0.0
    %357 = vmatpush1.msra.mxu0 0.0
    %358 = vmatprep.subr.mxu0 0.0
    %359 = vmatpush1.msra.mxu0 0.0
    %360 = vmatprep.subr.mxu0 0.0
    %361 = vmatpush1.msra.mxu0 0.0
    %362 = vmatprep.subr.mxu0 0.0
    %363 = vmatpush1.msra.mxu0 0.0
    %364 = vmatprep.subr.mxu0 0.0
    %365 = vmatpush1.msra.mxu0 0.0
    %366 = vmatprep.subr.mxu0 0.0
    %367 = vmatpush1.msra.mxu0 0.0
    %368 = vmatprep.subr.mxu0 0.0
    %369 = vmatpush1.msra.mxu0 0.0
    %370 = vmatprep.subr.mxu0 0.0
    %371 = vmatpush1.msra.mxu0 0.0
    %372 = vmatprep.subr.mxu0 0.0
    %373 = vmatpush1.msra.mxu0 0.0
    %374 = vmatprep.subr.mxu0 0.0
    %375 = vmatpush1.msra.mxu0 0.0
    %376 = vmatprep.subr.mxu0 0.0
    %377 = vmatpush1.msra.mxu0 0.0
    %378 = vmatprep.subr.mxu0 0.0
    %379 = vmatpush1.msra.mxu0 0.0
    %380 = vmatprep.subr.mxu0 0.0
    %381 = vmatpush1.msra.mxu0 0.0
    %382 = vmatprep.mubr.f32.mxu0 0.0
    %383 = vmatmul.mubr.f32.gmra.mrb[0].mxu0 %v78
    %v384 = vpop.f32.mrb[0].mxu0
    %v385 = vadd.f32 %v74, %v384
    %v386 = vpop.f32.mrb[0].mxu0
    %v387 = vadd.f32 %v74, %v386
    %388 = vdwg.mxu0
    %389 = vmatprep.subr.mxu0 %v316
    %390 = vmatpush1.xpose.msra.mxu0 %v314
    %391 = vmatprep.subr.mxu0 0.0
    %392 = vmatpush1.xpose.msra.mxu0 0.0
    %393 = vmatprep.subr.mxu0 0.0
    %394 = vmatpush1.xpose.msra.mxu0 0.0
    %395 = vmatprep.subr.mxu0 0.0
    %396 = vmatpush1.xpose.msra.mxu0 0.0
    %397 = vmatprep.subr.mxu0 0.0
    %398 = vmatpush1.xpose.msra.mxu0 0.0
    %399 = vmatprep.subr.mxu0 0.0
    %400 = vmatpush1.xpose.msra.mxu0 0.0
    %401 = vmatprep.subr.mxu0 0.0
    %402 = vmatpush1.xpose.msra.mxu0 0.0
    %403 = vmatprep.subr.mxu0 0.0
    %404 = vmatpush1.xpose.msra.mxu0 0.0
    %405 = vmatprep.subr.mxu0 0.0
    %406 = vmatpush1.xpose.msra.mxu0 0.0
    %407 = vmatprep.subr.mxu0 0.0
    %408 = vmatpush1.xpose.msra.mxu0 0.0
    %409 = vmatprep.subr.mxu0 0.0
    %410 = vmatpush1.xpose.msra.mxu0 0.0
    %411 = vmatprep.subr.mxu0 0.0
    %412 = vmatpush1.xpose.msra.mxu0 0.0
    %413 = vmatprep.subr.mxu0 0.0
    %414 = vmatpush1.xpose.msra.mxu0 0.0
    %415 = vmatprep.subr.mxu0 0.0
    %416 = vmatpush1.xpose.msra.mxu0 0.0
    %417 = vmatprep.subr.mxu0 0.0
    %418 = vmatpush1.xpose.msra.mxu0 0.0
    %419 = vmatprep.subr.mxu0 0.0
    %420 = vmatpush1.xpose.msra.mxu0 0.0
    %421 = vmatprep.subr.mxu0 0.0
    %422 = vmatpush1.xpose.msra.mxu0 0.0
    %423 = vmatprep.subr.mxu0 0.0
    %424 = vmatpush1.xpose.msra.mxu0 0.0
    %425 = vmatprep.subr.mxu0 0.0
    %426 = vmatpush1.xpose.msra.mxu0 0.0
    %427 = vmatprep.subr.mxu0 0.0
    %428 = vmatpush1.xpose.msra.mxu0 0.0
    %429 = vmatprep.subr.mxu0 0.0
    %430 = vmatpush1.xpose.msra.mxu0 0.0
    %431 = vmatprep.subr.mxu0 0.0
    %432 = vmatpush1.xpose.msra.mxu0 0.0
    %433 = vmatprep.subr.mxu0 0.0
    %434 = vmatpush1.xpose.msra.mxu0 0.0
    %435 = vmatprep.subr.mxu0 0.0
    %436 = vmatpush1.xpose.msra.mxu0 0.0
    %437 = vmatprep.subr.mxu0 0.0
    %438 = vmatpush1.xpose.msra.mxu0 0.0
    %439 = vmatprep.subr.mxu0 0.0
    %440 = vmatpush1.xpose.msra.mxu0 0.0
    %441 = vmatprep.subr.mxu0 0.0
    %442 = vmatpush1.xpose.msra.mxu0 0.0
    %443 = vmatprep.subr.mxu0 0.0
    %444 = vmatpush1.xpose.msra.mxu0 0.0
    %445 = vmatprep.subr.mxu0 0.0
    %446 = vmatpush1.xpose.msra.mxu0 0.0
    %447 = vmatprep.subr.mxu0 0.0
    %448 = vmatpush1.xpose.msra.mxu0 0.0
    %449 = vmatprep.subr.mxu0 0.0
    %450 = vmatpush1.xpose.msra.mxu0 0.0
    %451 = vmatprep.subr.mxu0 0.0
    %452 = vmatpush1.xpose.msra.mxu0 0.0
    %453 = vmatprep.mubr.f32.mxu0 %v174
    %454 = vmatmul.mubr.f32.gmra.mrb[0].mxu0 %v172
    %v455 = vpop.f32.mrb[0].mxu0
    %v456 = vadd.f32 0.0, %v455
    %v457 = vpop.f32.mrb[0].mxu0
    %458 = vdwg.mxu0
    %vm459 = vcmp.gt.f32.partialorder %v456, 0.0
    %v460 = vmul.f32 %v456, 0.2
    %v461 = vsel %vm459, %v456, %v460
    %vm462 = vcmask 64512
    %v463 = vsel %vm462, %v461, -inf
    %v464 = vrot.slane %v463, 4
    %v465 = vmax.f32 %v463, %v464
    %v466 = vrot.slane %v465, 2
    %v467 = vmax.f32 %v465, %v466
    %v468 = vrot.slane %v467, 1
    %v469 = vmax.f32 %v467, %v468
    %v470 = vsub.f32 %v461, %v469
    %v471 = vmul.f32 %v470, 1.442695
    %v472 = vpow.pop %v471
    %v473 = vsel %vm462, %v472, 0.0
    %v474 = vrot.slane %v473, 4
    %v475 = vadd.f32 %v473, %v474
    %v476 = vrot.slane %v475, 2
    %v477 = vadd.f32 %v475, %v476
    %v478 = vrot.slane %v477, 1
    %v479 = vadd.f32 %v477, %v478
    %v480 = vrcp.pop %v479
    %v481 = vmul.f32 %v472, %v480
    %v483 = vsel %vm462, %v481, 0
    %485 = vmatprep.subr.mxu0 %v174
    %486 = vmatpush1.msra.mxu0 %v172
    %487 = vmatprep.subr.mxu0 0.0
    %488 = vmatpush1.msra.mxu0 0.0
    %489 = vmatprep.subr.mxu0 0.0
    %490 = vmatpush1.msra.mxu0 0.0
    %491 = vmatprep.subr.mxu0 0.0
    %492 = vmatpush1.msra.mxu0 0.0
    %493 = vmatprep.subr.mxu0 0.0
    %494 = vmatpush1.msra.mxu0 0.0
    %495 = vmatprep.subr.mxu0 0.0
    %496 = vmatpush1.msra.mxu0 0.0
    %497 = vmatprep.subr.mxu0 0.0
    %498 = vmatpush1.msra.mxu0 0.0
    %499 = vmatprep.subr.mxu0 0.0
    %500 = vmatpush1.msra.mxu0 0.0
    %501 = vmatprep.subr.mxu0 0.0
    %502 = vmatpush1.msra.mxu0 0.0
    %503 = vmatprep.subr.mxu0 0.0
    %504 = vmatpush1.msra.mxu0 0.0
    %505 = vmatprep.subr.mxu0 0.0
    %506 = vmatpush1.msra.mxu0 0.0
    %507 = vmatprep.subr.mxu0 0.0
    %508 = vmatpush1.msra.mxu0 0.0
    %509 = vmatprep.subr.mxu0 0.0
    %510 = vmatpush1.msra.mxu0 0.0
    %511 = vmatprep.subr.mxu0 0.0
    %512 = vmatpush1.msra.mxu0 0.0
    %513 = vmatprep.subr.mxu0 0.0
    %514 = vmatpush1.msra.mxu0 0.0
    %515 = vmatprep.subr.mxu0 0.0
    %516 = vmatpush1.msra.mxu0 0.0
    %517 = vmatprep.subr.mxu0 0.0
    %518 = vmatpush1.msra.mxu0 0.0
    %519 = vmatprep.subr.mxu0 0.0
    %520 = vmatpush1.msra.mxu0 0.0
    %521 = vmatprep.subr.mxu0 0.0
    %522 = vmatpush1.msra.mxu0 0.0
    %523 = vmatprep.subr.mxu0 0.0
    %524 = vmatpush1.msra.mxu0 0.0
    %525 = vmatprep.subr.mxu0 0.0
    %526 = vmatpush1.msra.mxu0 0.0
    %527 = vmatprep.subr.mxu0 0.0
    %528 = vmatpush1.msra.mxu0 0.0
    %529 = vmatprep.subr.mxu0 0.0
    %530 = vmatpush1.msra.mxu0 0.0
    %531 = vmatprep.subr.mxu0 0.0
    %532 = vmatpush1.msra.mxu0 0.0
    %533 = vmatprep.subr.mxu0 0.0
    %534 = vmatpush1.msra.mxu0 0.0
    %535 = vmatprep.subr.mxu0 0.0
    %536 = vmatpush1.msra.mxu0 0.0
    %537 = vmatprep.subr.mxu0 0.0
    %538 = vmatpush1.msra.mxu0 0.0
    %539 = vmatprep.subr.mxu0 0.0
    %540 = vmatpush1.msra.mxu0 0.0
    %541 = vmatprep.subr.mxu0 0.0
    %542 = vmatpush1.msra.mxu0 0.0
    %543 = vmatprep.subr.mxu0 0.0
    %544 = vmatpush1.msra.mxu0 0.0
    %545 = vmatprep.subr.mxu0 0.0
    %546 = vmatpush1.msra.mxu0 0.0
    %547 = vmatprep.subr.mxu0 0.0
    %548 = vmatpush1.msra.mxu0 0.0
    %549 = vmatprep.mubr.f32.mxu0 0.0
    %550 = vmatmul.mubr.f32.gmra.mrb[0].mxu0 %v483
    %v551 = vpop.f32.mrb[0].mxu0
    %v552 = vadd.f32 0.0, %v551
    %v553 = vpop.f32.mrb[0].mxu0
    %v554 = vadd.f32 0.0, %v553
    %555 = vdwg.mxu0
    %556 = vst [vmem:[#allocation5] sm:$0xff] %v552
    %557 = vst [vmem:[#allocation5 + $0x8] sm:$0xff] %v554
    %558 = vmatprep.subr.mxu0 %v387
    %559 = vmatpush1.xpose.msra.mxu0 %v385
    %560 = vmatprep.subr.mxu0 0.0
    %561 = vmatpush1.xpose.msra.mxu0 0.0
    %562 = vmatprep.subr.mxu0 0.0
    %563 = vmatpush1.xpose.msra.mxu0 0.0
    %564 = vmatprep.subr.mxu0 0.0
    %565 = vmatpush1.xpose.msra.mxu0 0.0
    %566 = vmatprep.subr.mxu0 0.0
    %567 = vmatpush1.xpose.msra.mxu0 0.0
    %568 = vmatprep.subr.mxu0 0.0
    %569 = vmatpush1.xpose.msra.mxu0 0.0
    %570 = vmatprep.subr.mxu0 0.0
    %571 = vmatpush1.xpose.msra.mxu0 0.0
    %572 = vmatprep.subr.mxu0 0.0
    %573 = vmatpush1.xpose.msra.mxu0 0.0
    %574 = vmatprep.subr.mxu0 0.0
    %575 = vmatpush1.xpose.msra.mxu0 0.0
    %576 = vmatprep.subr.mxu0 0.0
    %577 = vmatpush1.xpose.msra.mxu0 0.0
    %578 = vmatprep.subr.mxu0 0.0
    %579 = vmatpush1.xpose.msra.mxu0 0.0
    %580 = vmatprep.subr.mxu0 0.0
    %581 = vmatpush1.xpose.msra.mxu0 0.0
    %582 = vmatprep.subr.mxu0 0.0
    %583 = vmatpush1.xpose.msra.mxu0 0.0
    %584 = vmatprep.subr.mxu0 0.0
    %585 = vmatpush1.xpose.msra.mxu0 0.0
    %586 = vmatprep.subr.mxu0 0.0
    %587 = vmatpush1.xpose.msra.mxu0 0.0
    %588 = vmatprep.subr.mxu0 0.0
    %589 = vmatpush1.xpose.msra.mxu0 0.0
    %590 = vmatprep.subr.mxu0 0.0
    %591 = vmatpush1.xpose.msra.mxu0 0.0
    %592 = vmatprep.subr.mxu0 0.0
    %593 = vmatpush1.xpose.msra.mxu0 0.0
    %594 = vmatprep.subr.mxu0 0.0
    %595 = vmatpush1.xpose.msra.mxu0 0.0
    %596 = vmatprep.subr.mxu0 0.0
    %597 = vmatpush1.xpose.msra.mxu0 0.0
    %598 = vmatprep.subr.mxu0 0.0
    %599 = vmatpush1.xpose.msra.mxu0 0.0
    %600 = vmatprep.subr.mxu0 0.0
    %601 = vmatpush1.xpose.msra.mxu0 0.0
    %602 = vmatprep.subr.mxu0 0.0
    %603 = vmatpush1.xpose.msra.mxu0 0.0
    %604 = vmatprep.subr.mxu0 0.0
    %605 = vmatpush1.xpose.msra.mxu0 0.0
    %606 = vmatprep.subr.mxu0 0.0
    %607 = vmatpush1.xpose.msra.mxu0 0.0
    %608 = vmatprep.subr.mxu0 0.0
    %609 = vmatpush1.xpose.msra.mxu0 0.0
    %610 = vmatprep.subr.mxu0 0.0
    %611 = vmatpush1.xpose.msra.mxu0 0.0
    %612 = vmatprep.subr.mxu0 0.0
    %613 = vmatpush1.xpose.msra.mxu0 0.0
    %614 = vmatprep.subr.mxu0 0.0
    %615 = vmatpush1.xpose.msra.mxu0 0.0
    %616 = vmatprep.subr.mxu0 0.0
    %617 = vmatpush1.xpose.msra.mxu0 0.0
    %618 = vmatprep.subr.mxu0 0.0
    %619 = vmatpush1.xpose.msra.mxu0 0.0
    %620 = vmatprep.subr.mxu0 0.0
    %621 = vmatpush1.xpose.msra.mxu0 0.0
    %622 = vmatprep.mubr.f32.mxu0 %v245
    %623 = vmatmul.mubr.f32.gmra.mrb[0].mxu0 %v243
    %v624 = vpop.f32.mrb[0].mxu0
    %v625 = vadd.f32 0.0, %v624
    %v626 = vpop.f32.mrb[0].mxu0
    %627 = vdwg.mxu0
    %vm628 = vcmp.gt.f32.partialorder %v625, 0.0
    %v629 = vmul.f32 %v625, 0.2
    %v630 = vsel %vm628, %v625, %v629
    %v631 = vsel %vm462, %v630, -inf
    %v632 = vrot.slane %v631, 4
    %v633 = vmax.f32 %v631, %v632
    %v634 = vrot.slane %v633, 2
    %v635 = vmax.f32 %v633, %v634
    %v636 = vrot.slane %v635, 1
    %v637 = vmax.f32 %v635, %v636
    %v638 = vsub.f32 %v630, %v637
    %v639 = vmul.f32 %v638, 1.442695
    %v640 = vpow.pop %v639
    %v641 = vsel %vm462, %v640, 0.0
    %v642 = vrot.slane %v641, 4
    %v643 = vadd.f32 %v641, %v642
    %v644 = vrot.slane %v643, 2
    %v645 = vadd.f32 %v643, %v644
    %v646 = vrot.slane %v645, 1
    %v647 = vadd.f32 %v645, %v646
    %v648 = vrcp.pop %v647
    %v649 = vmul.f32 %v640, %v648
    %v651 = vsel %vm462, %v649, 0
    %653 = vmatprep.subr.mxu0 %v245
    %654 = vmatpush1.msra.mxu0 %v243
    %655 = vmatprep.subr.mxu0 0.0
    %656 = vmatpush1.msra.mxu0 0.0
    %657 = vmatprep.subr.mxu0 0.0
    %658 = vmatpush1.msra.mxu0 0.0
    %659 = vmatprep.subr.mxu0 0.0
    %660 = vmatpush1.msra.mxu0 0.0
    %661 = vmatprep.subr.mxu0 0.0
    %662 = vmatpush1.msra.mxu0 0.0
    %663 = vmatprep.subr.mxu0 0.0
    %664 = vmatpush1.msra.mxu0 0.0
    %665 = vmatprep.subr.mxu0 0.0
    %666 = vmatpush1.msra.mxu0 0.0
    %667 = vmatprep.subr.mxu0 0.0
    %668 = vmatpush1.msra.mxu0 0.0
    %669 = vmatprep.subr.mxu0 0.0
    %670 = vmatpush1.msra.mxu0 0.0
    %671 = vmatprep.subr.mxu0 0.0
    %672 = vmatpush1.msra.mxu0 0.0
    %673 = vmatprep.subr.mxu0 0.0
    %674 = vmatpush1.msra.mxu0 0.0
    %675 = vmatprep.subr.mxu0 0.0
    %676 = vmatpush1.msra.mxu0 0.0
    %677 = vmatprep.subr.mxu0 0.0
    %678 = vmatpush1.msra.mxu0 0.0
    %679 = vmatprep.subr.mxu0 0.0
    %680 = vmatpush1.msra.mxu0 0.0
    %681 = vmatprep.subr.mxu0 0.0
    %682 = vmatpush1.msra.mxu0 0.0
    %683 = vmatprep.subr.mxu0 0.0
    %684 = vmatpush1.msra.mxu0 0.0
    %685 = vmatprep.subr.mxu0 0.0
    %686 = vmatpush1.msra.mxu0 0.0
    %687 = vmatprep.subr.mxu0 0.0
    %688 = vmatpush1.msra.mxu0 0.0
    %689 = vmatprep.subr.mxu0 0.0
    %690 = vmatpush1.msra.mxu0 0.0
    %691 = vmatprep.subr.mxu0 0.0
    %692 = vmatpush1.msra.mxu0 0.0
    %693 = vmatprep.subr.mxu0 0.0
    %694 = vmatpush1.msra.mxu0 0.0
    %695 = vmatprep.subr.mxu0 0.0
    %696 = vmatpush1.msra.mxu0 0.0
    %697 = vmatprep.subr.mxu0 0.0
    %698 = vmatpush1.msra.mxu0 0.0
    %699 = vmatprep.subr.mxu0 0.0
    %700 = vmatpush1.msra.mxu0 0.0
    %701 = vmatprep.subr.mxu0 0.0
    %702 = vmatpush1.msra.mxu0 0.0
    %703 = vmatprep.subr.mxu0 0.0
    %704 = vmatpush1.msra.mxu0 0.0
    %705 = vmatprep.subr.mxu0 0.0
    %706 = vmatpush1.msra.mxu0 0.0
    %707 = vmatprep.subr.mxu0 0.0
    %708 = vmatpush1.msra.mxu0 0.0
    %709 = vmatprep.subr.mxu0 0.0
    %710 = vmatpush1.msra.mxu0 0.0
    %711 = vmatprep.subr.mxu0 0.0
    %712 = vmatpush1.msra.mxu0 0.0
    %713 = vmatprep.subr.mxu0 0.0
    %714 = vmatpush1.msra.mxu0 0.0
    %715 = vmatprep.subr.mxu0 0.0
    %716 = vmatpush1.msra.mxu0 0.0
    %717 = vmatprep.mubr.f32.mxu0 0.0
    %718 = vmatmul.mubr.f32.gmra.mrb[0].mxu0 %v651
    %v719 = vpop.f32.mrb[0].mxu0
    %v720 = vadd.f32 0.0, %v719
    %v721 = vpop.f32.mrb[0].mxu0
    %v722 = vadd.f32 0.0, %v721
    %723 = vdwg.mxu0
    %s724 = scalar_lea.vmem [#allocation5], 16
    %725 = vst [vmem:[%s724] sm:$0xff] %v720
    %726 = vst [vmem:[%s724 + $0x8] sm:$0xff] %v722
    // Predicated region
    $region18: #{tpu_custom_call.1} parent=1 // pred_check
      _
    $region19: #{tpu_custom_call.1} parent=1 // pred_check_branch
      %728 = sbr.rel (0) target = $region21
    $region20: #{tpu_custom_call.1} parent=1 // pred_region
      %s730 = ssub.s32 512, 512
      %731 = vsyncadd [#allocation4], %s730
      %s732 = sshll.u32 [#allocation5], 4
      %s733 = int_to_ptr.vmem [resolvable:$true] %s732
      %738 = dma.vmem_to_hbm [thread:$0]  %s733, 512, %s3, [#allocation4], 256, 256, 16
    $region21: #{tpu_custom_call.1} parent=1 // pred_fallthru
      _
    // Predicated region
    $region22: #{tpu_custom_call.1} parent=1 // pred_check
      _
    $region23: #{tpu_custom_call.1} parent=1 // pred_check_branch
      %740 = sbr.rel (0) target = $region25
    $region24: #{tpu_custom_call.1} parent=1 // pred_region
      %741 = dma.done [#allocation4], 512
    $region25: #{tpu_custom_call.1} parent=1 // pred_fallthru
      _
    %742 = vsyncpa [#allocation3], 1
    %743 = vsyncpa [#allocation4], 1

</llo_original>
